<compile_context>
chip_gen: v7x
topology: tpu7x:2x2x1
jax: 0.10.0
libtpu: 0.0.40
codegen_flags: <defaults>
</compile_context>

<pallas_src>
import jax
import jax.numpy as jnp
from jax.experimental import pallas as pl
from jax.experimental.pallas import tpu as pltpu


def mlp_kernel(x_ref, w1_ref, b1_ref, w2_ref, b2_ref, w3_ref, b3_ref, o_ref):
    # fc1 + relu  (bf16 operands, f32 accumulation; bias/relu in f32)
    h1 = jnp.dot(x_ref[...], w1_ref[...], preferred_element_type=jnp.float32)
    h1 = jnp.maximum(h1 + b1_ref[...], 0.0).astype(jnp.bfloat16)
    # fc2 + relu
    h2 = jnp.dot(h1, w2_ref[...], preferred_element_type=jnp.float32)
    h2 = jnp.maximum(h2 + b2_ref[...], 0.0).astype(jnp.bfloat16)
    # fc3 (no activation); b3 is a scalar in SMEM
    out = jnp.dot(h2, w3_ref[...], preferred_element_type=jnp.float32)
    o_ref[...] = (out + b3_ref[0, 0]).astype(o_ref.dtype)


def neural_network_forward(x, w1, b1, w2, b2, w3, b3, *, tb=128, h_pad=128):
    B, d_in = x.shape
    h1 = w1.shape[1]
    h2 = w2.shape[1]
    d_out = w3.shape[1]

    # --- weight prep (done once, outside the kernel): bf16 + zero-pad hidden dims ---
    # Zero padding preserves semantics: padded lanes carry 0 through relu and matmuls.
    w1p = jnp.zeros((d_in, h_pad), jnp.bfloat16).at[:, :h1].set(w1.astype(jnp.bfloat16))
    b1p = jnp.zeros((1, h_pad), jnp.float32).at[:, :h1].set(b1.astype(jnp.float32))
    w2p = jnp.zeros((h_pad, h_pad), jnp.bfloat16).at[:h1, :h2].set(w2.astype(jnp.bfloat16))
    b2p = jnp.zeros((1, h_pad), jnp.float32).at[:, :h2].set(b2.astype(jnp.float32))
    w3p = jnp.zeros((h_pad, d_out), jnp.bfloat16).at[:h2, :].set(w3.astype(jnp.bfloat16))
    b3s = b3.astype(jnp.float32).reshape(1, d_out)  # (1,1) scalar -> SMEM

    # --- batch tiling: pad B up to a multiple of tb, tile over batch ---
    n_blk = pl.cdiv(B, tb)
    b_padded = n_blk * tb
    xp = jnp.zeros((b_padded, d_in), jnp.bfloat16).at[:B, :].set(x.astype(jnp.bfloat16))

    flops = 2 * b_padded * (d_in * h_pad + h_pad * h_pad + h_pad * d_out)
    bytes_accessed = (
        xp.size * 2 + w1p.size * 2 + w2p.size * 2 + w3p.size * 2
        + b1p.size * 4 + b2p.size * 4 + 4 + b_padded * d_out * 4
    )

    out = pl.pallas_call(
        mlp_kernel,
        out_shape=jax.ShapeDtypeStruct((b_padded, d_out), jnp.float32),
        grid=(n_blk,),
        in_specs=[
            pl.BlockSpec((tb, d_in), lambda i: (i, 0)),        # x tile, streamed over batch
            pl.BlockSpec((d_in, h_pad), lambda i: (0, 0)),     # w1 resident
            pl.BlockSpec((1, h_pad), lambda i: (0, 0)),        # b1 resident
            pl.BlockSpec((h_pad, h_pad), lambda i: (0, 0)),    # w2 resident
            pl.BlockSpec((1, h_pad), lambda i: (0, 0)),        # b2 resident
            pl.BlockSpec((h_pad, d_out), lambda i: (0, 0)),    # w3 resident
            pl.BlockSpec(memory_space=pltpu.MemorySpace.SMEM), # b3 scalar in SMEM
        ],
        # out_size == 1: no useful N tiling; keep single lane-narrow column output.
        out_specs=pl.BlockSpec((tb, d_out), lambda i: (i, 0)),
        compiler_params=pltpu.CompilerParams(
            dimension_semantics=("parallel",),
        ),
        cost_estimate=pl.CostEstimate(
            flops=flops, transcendentals=0, bytes_accessed=bytes_accessed
        ),
    )(xp, w1p, b1p, w2p, b2p, w3p, b3s)

    return out[:B]


def init_linear(key, fan_in, fan_out):
    # PyTorch nn.Linear default init: U(-1/sqrt(fan_in), 1/sqrt(fan_in))
    kw, kb = jax.random.split(key)
    bound = 1.0 / jnp.sqrt(jnp.float32(fan_in))
    w = jax.random.uniform(kw, (fan_in, fan_out), jnp.float32, -bound, bound)
    b = jax.random.uniform(kb, (1, fan_out), jnp.float32, -bound, bound)
    return w, b


if __name__ == "__main__":
    input_size = 16
    hidden_size1 = 64
    hidden_size2 = 32
    output_size = 1
    batch = 256  # 2 batch tiles of 128 rows -> exercises the grid

    key = jax.random.PRNGKey(0)
    kx, k1, k2, k3 = jax.random.split(key, 4)

    x = jax.random.normal(kx, (batch, input_size), jnp.float32)
    w1, b1 = init_linear(k1, input_size, hidden_size1)
    w2, b2 = init_linear(k2, hidden_size1, hidden_size2)
    w3, b3 = init_linear(k3, hidden_size2, output_size)

    out = neural_network_forward(x, w1, b1, w2, b2, w3, b3)
    out = jax.block_until_ready(out)
    assert out.shape == (batch, output_size)

    # Reference 1: same arithmetic the kernel does (bf16 operands, f32 accumulation).
    def bf(a):
        return a.astype(jnp.bfloat16).astype(jnp.float32)

    r = jnp.maximum(bf(x) @ bf(w1) + b1, 0.0)
    r = jnp.maximum(bf(r) @ bf(w2) + b2, 0.0)
    ref_bf16 = bf(r) @ bf(w3) + b3
    assert jnp.allclose(out, ref_bf16, atol=1e-3, rtol=1e-3)

    # Reference 2: pure-f32 PyTorch-equivalent forward (loose tolerance for bf16 operands).
    r32 = jnp.maximum(x @ w1 + b1, 0.0)
    r32 = jnp.maximum(r32 @ w2 + b2, 0.0)
    ref_f32 = r32 @ w3 + b3
    assert jnp.allclose(out, ref_f32, atol=5e-2, rtol=5e-2)

    print("KERNEL_OK")
</pallas_src>

<mosaic_0001>
module attributes {stable_mosaic.version = 11 : i64} {
  func.func @mlp_kernel(%arg0: i32, %arg1: memref<128x16xbf16, #tpu.memory_space<vmem>>, %arg2: memref<16x128xbf16, #tpu.memory_space<vmem>>, %arg3: memref<1x128xf32, #tpu.memory_space<vmem>>, %arg4: memref<128x128xbf16, #tpu.memory_space<vmem>>, %arg5: memref<1x128xf32, #tpu.memory_space<vmem>>, %arg6: memref<128x1xbf16, #tpu.memory_space<vmem>>, %arg7: memref<1x1xf32, #tpu.memory_space<smem>>, %arg8: memref<128x1xf32, #tpu.memory_space<vmem>>) attributes {dimension_semantics = [#tpu.dimension_semantics<parallel>], iteration_bounds = array<i64: 2>, scalar_prefetch = 0 : i64, scratch_operands = 0 : i64, tpu.core_type = #tpu.core_type<tc>, window_params = [{transform_indices = @transform_0, window_bounds = array<i64: 128, 16>}, {pipeline_mode = #tpu.pipeline_mode<synchronous>, transform_indices = @transform_1, window_bounds = array<i64: 16, 128>}, {pipeline_mode = #tpu.pipeline_mode<synchronous>, transform_indices = @transform_2, window_bounds = array<i64: 1, 128>}, {pipeline_mode = #tpu.pipeline_mode<synchronous>, transform_indices = @transform_3, window_bounds = array<i64: 128, 128>}, {pipeline_mode = #tpu.pipeline_mode<synchronous>, transform_indices = @transform_4, window_bounds = array<i64: 1, 128>}, {pipeline_mode = #tpu.pipeline_mode<synchronous>, transform_indices = @transform_5, window_bounds = array<i64: 128, 1>}, {transform_indices = @transform_6, window_bounds = array<i64: 1, 1>}, {transform_indices = @transform_7, window_bounds = array<i64: 128, 1>}]} {
    %c0 = arith.constant 0 : index
    %c0_0 = arith.constant 0 : index
    %0 = vector.load %arg1[%c0, %c0_0] : memref<128x16xbf16, #tpu.memory_space<vmem>>, vector<128x16xbf16>
    %c0_1 = arith.constant 0 : index
    %c0_2 = arith.constant 0 : index
    %1 = vector.load %arg2[%c0_1, %c0_2] : memref<16x128xbf16, #tpu.memory_space<vmem>>, vector<16x128xbf16>
    %cst = arith.constant dense<0.000000e+00> : vector<128x128xf32>
    %2 = tpu.matmul %0, %1, %cst {dimension_numbers = #tpu.dot_dimension_numbers<[1], [0], [0], [1], [0, 0, 1, 1], [], []>} : vector<128x16xbf16>, vector<16x128xbf16>, vector<128x128xf32> -> vector<128x128xf32>
    %c0_3 = arith.constant 0 : index
    %c0_4 = arith.constant 0 : index
    %3 = vector.load %arg3[%c0_3, %c0_4] : memref<1x128xf32, #tpu.memory_space<vmem>>, vector<1x128xf32>
    %4 = vector.broadcast %3 : vector<1x128xf32> to vector<128x128xf32>
    %5 = arith.addf %2, %4 : vector<128x128xf32>
    %cst_5 = arith.constant 0.000000e+00 : f32
    %6 = vector.broadcast %cst_5 : f32 to vector<128x128xf32>
    %7 = arith.maximumf %5, %6 : vector<128x128xf32>
    %8 = arith.truncf %7 : vector<128x128xf32> to vector<128x128xbf16>
    %c0_6 = arith.constant 0 : index
    %c0_7 = arith.constant 0 : index
    %9 = vector.load %arg4[%c0_6, %c0_7] : memref<128x128xbf16, #tpu.memory_space<vmem>>, vector<128x128xbf16>
    %cst_8 = arith.constant dense<0.000000e+00> : vector<128x128xf32>
    %10 = tpu.matmul %8, %9, %cst_8 {dimension_numbers = #tpu.dot_dimension_numbers<[1], [0], [0], [1], [0, 0, 1, 1], [], []>} : vector<128x128xbf16>, vector<128x128xbf16>, vector<128x128xf32> -> vector<128x128xf32>
    %c0_9 = arith.constant 0 : index
    %c0_10 = arith.constant 0 : index
    %11 = vector.load %arg5[%c0_9, %c0_10] : memref<1x128xf32, #tpu.memory_space<vmem>>, vector<1x128xf32>
    %12 = vector.broadcast %11 : vector<1x128xf32> to vector<128x128xf32>
    %13 = arith.addf %10, %12 : vector<128x128xf32>
    %cst_11 = arith.constant 0.000000e+00 : f32
    %14 = vector.broadcast %cst_11 : f32 to vector<128x128xf32>
    %15 = arith.maximumf %13, %14 : vector<128x128xf32>
    %16 = arith.truncf %15 : vector<128x128xf32> to vector<128x128xbf16>
    %c0_12 = arith.constant 0 : index
    %c0_13 = arith.constant 0 : index
    %17 = vector.load %arg6[%c0_12, %c0_13] : memref<128x1xbf16, #tpu.memory_space<vmem>>, vector<128x1xbf16>
    %cst_14 = arith.constant dense<0.000000e+00> : vector<128x1xf32>
    %18 = tpu.matmul %16, %17, %cst_14 {dimension_numbers = #tpu.dot_dimension_numbers<[1], [0], [0], [1], [0, 0, 1, 1], [], []>} : vector<128x128xbf16>, vector<128x1xbf16>, vector<128x1xf32> -> vector<128x1xf32>
    %c0_15 = arith.constant 0 : index
    %c0_16 = arith.constant 0 : index
    %19 = memref.load %arg7[%c0_15, %c0_16] : memref<1x1xf32, #tpu.memory_space<smem>>
    %20 = vector.broadcast %19 : f32 to vector<128x1xf32>
    %21 = arith.addf %18, %20 : vector<128x1xf32>
    %c0_17 = arith.constant 0 : index
    %c0_18 = arith.constant 0 : index
    %22 = vector.load %arg8[%c0_17, %c0_18] : memref<128x1xf32, #tpu.memory_space<vmem>>, vector<128x1xf32>
    tpu.vector_store %arg8[%c0_17, %c0_18], %21 {strides = array<i32>} : memref<128x1xf32, #tpu.memory_space<vmem>>, vector<128x1xf32>,
    return
  }
  func.func @transform_0(%arg0: i32) -> (i32, i32) {
    %c0_i32 = arith.constant 0 : i32
    %c0_i32_0 = arith.constant 0 : i32
    return %arg0, %c0_i32 : i32, i32
  }
  func.func @transform_1(%arg0: i32) -> (i32, i32) {
    %c0_i32 = arith.constant 0 : i32
    %c0_i32_0 = arith.constant 0 : i32
    %c0_i32_1 = arith.constant 0 : i32
    return %c0_i32, %c0_i32_0 : i32, i32
  }
  func.func @transform_2(%arg0: i32) -> (i32, i32) {
    %c0_i32 = arith.constant 0 : i32
    %c0_i32_0 = arith.constant 0 : i32
    %c0_i32_1 = arith.constant 0 : i32
    return %c0_i32, %c0_i32_0 : i32, i32
  }
  func.func @transform_3(%arg0: i32) -> (i32, i32) {
    %c0_i32 = arith.constant 0 : i32
    %c0_i32_0 = arith.constant 0 : i32
    %c0_i32_1 = arith.constant 0 : i32
    return %c0_i32, %c0_i32_0 : i32, i32
  }
  func.func @transform_4(%arg0: i32) -> (i32, i32) {
    %c0_i32 = arith.constant 0 : i32
    %c0_i32_0 = arith.constant 0 : i32
    %c0_i32_1 = arith.constant 0 : i32
    return %c0_i32, %c0_i32_0 : i32, i32
  }
  func.func @transform_5(%arg0: i32) -> (i32, i32) {
    %c0_i32 = arith.constant 0 : i32
    %c0_i32_0 = arith.constant 0 : i32
    %c0_i32_1 = arith.constant 0 : i32
    return %c0_i32, %c0_i32_0 : i32, i32
  }
  func.func @transform_6(%arg0: i32) -> (i32, i32) {
    %c0_i32 = arith.constant 0 : i32
    %c0_i32_0 = arith.constant 0 : i32
    %c0_i32_1 = arith.constant 0 : i32
    return %c0_i32, %c0_i32_0 : i32, i32
  }
  func.func @transform_7(%arg0: i32) -> (i32, i32) {
    %c0_i32 = arith.constant 0 : i32
    %c0_i32_0 = arith.constant 0 : i32
    return %arg0, %c0_i32 : i32, i32
  }
}

</mosaic_0001>

<llo_original>
// kernel: tpu_custom_call.1
$region0: #{tpu_custom_call.1}
  #allocation0 [shape = 'u32[]', space=smem, size = 0x4, offset = 0x4, fixed_abs, tag = 'smem constant byte address 0x4 - core index']
  #allocation1 [shape = 'u32[144,128]{1,0:T(1,128)}', space=vmem, size = 0x12000, scoped, tag = 'internal scratch']
  #allocation2 [shape = 'f32[1,1]{1,0:T(1,128)S(6)}', space=smem, size = 0x200, scoped, tag = 'scoped memory for tpu_custom_call.1']
  %s0 = inlined_call_operand.vmem [shape: bf16[256,16], index: 0, kind: input, shape index: {}]
  %s1 = inlined_call_operand.vmem [shape: bf16[16,128], index: 1, kind: input, shape index: {}]
  %s2 = inlined_call_operand.vmem [shape: f32[1,128], index: 2, kind: input, shape index: {}]
  %s3 = inlined_call_operand.vmem [shape: bf16[128,128], index: 3, kind: input, shape index: {}]
  %s4 = inlined_call_operand.vmem [shape: f32[1,128], index: 4, kind: input, shape index: {}]
  %s5 = inlined_call_operand.vmem [shape: bf16[128,1], index: 5, kind: input, shape index: {}]
  %s6 = inlined_call_operand.<no memory space> [shape: f32[1,1], index: 6, kind: input, shape index: {}]
  %s7 = inlined_call_operand.vmem [shape: f32[256,1], index: 7, kind: output, shape index: {}]
  %s8 = sld [smem:[#allocation0]]
  $region61: #{tpu_custom_call.1} parent=0
    _
  %s10 = ssub.s32 1, %s8
  %s11 = scalar_select 0, %s10, %s8
  %12 = sst [smem:[#allocation2]] %s6
  loop: start=0, step=1, limit=4
  $region2: #{tpu_custom_call.1} parent=0 // loop_pre_header
    _
  $region3: #{tpu_custom_call.1} parent=0 // loop_header
    %s14 = sphi 0, %s18
    %p15 = scmp.ge.s32.totalorder %s14, 4
    %s24 = sphi 0, %s26
    %s27 = sphi 0, %s24
    %s28 = sphi 0, %s27
    %s44 = sphi 0, %s28
    %s48 = sphi 0, %s48
    %s50 = sphi 0, %s48
    %s51 = sphi 0, %s50
    %s65 = sphi 0, %s51
    %s69 = sphi 0, %s69
    %s71 = sphi 0, %s69
    %s72 = sphi 0, %s71
    %s86 = sphi 0, %s72
    %s90 = sphi 0, %s90
    %s92 = sphi 0, %s90
    %s93 = sphi 0, %s92
    %s107 = sphi 0, %s93
    %s111 = sphi 0, %s111
    %s113 = sphi 0, %s111
    %s114 = sphi 0, %s113
    %s128 = sphi 0, %s114
    %s132 = sphi 0, %s132
    %s134 = sphi 0, %s132
    %s135 = sphi 0, %s134
    %s149 = sphi 0, %s135
    %s153 = sphi 0, %s153
    %s155 = sphi 0, %s153
    %s156 = sphi 0, %s155
    %s170 = sphi 0, %s156
    %s176 = sphi 0, %s178
    %s179 = sphi 0, %s176
    %s180 = sphi 0, %s179
    %s196 = sphi 0, %s180
  $region4: #{tpu_custom_call.1} parent=0 // loop_header_branch
    %17 = sbr.rel (%p15) target = $region8
  $region5: #{tpu_custom_call.1} parent=0 // loop_body
    %s19 = ssub.s32 %s14, 1
    %s20 = ssub.s32 %s14, 2
    %s21 = sadd.s32 %s14, 1
    %s22 = ssub.s32 %s14, %s21
    %p23 = scmp.eq.s32.totalorder %s22, 0
    %s25 = sadd.s32 %s24, 1
    %s26 = scalar_select %p23, %s24, %s25
    %p29 = pneg %p23
    %p30 = scmp.eq.s32.totalorder %s14, 1
    %p31 = por %p29, %p30
    %p32 = scmp.ne.s32.totalorder %s24, %s27
    %p33 = scmp.eq.s32.totalorder %s14, 0
    %p34 = por %p32, %p33
    %p35 = scmp.ne.s32.totalorder %s24, %s27
    %p36 = scmp.eq.s32.totalorder %s19, 1
    %p37 = por %p35, %p36
    %p38 = scmp.ne.s32.totalorder %s27, %s28
    %p39 = scmp.eq.s32.totalorder %s19, 0
    %p40 = por %p38, %p39
    %p41 = scmp.ne.s32.totalorder %s27, %s28
    %p42 = scmp.eq.s32.totalorder %s20, 1
    %p43 = por %p41, %p42
    %p45 = scmp.ne.s32.totalorder %s28, %s44
    %p46 = scmp.eq.s32.totalorder %s20, 0
    %p47 = por %p45, %p46
    %s49 = sadd.s32 %s48, 1
    %p52 = scmp.eq.s32.totalorder %s14, 1
    %p53 = scmp.ne.s32.totalorder %s48, %s50
    %p54 = scmp.eq.s32.totalorder %s14, 0
    %p55 = por %p53, %p54
    %p56 = scmp.ne.s32.totalorder %s48, %s50
    %p57 = scmp.eq.s32.totalorder %s19, 1
    %p58 = por %p56, %p57
    %p59 = scmp.ne.s32.totalorder %s50, %s51
    %p60 = scmp.eq.s32.totalorder %s19, 0
    %p61 = por %p59, %p60
    %p62 = scmp.ne.s32.totalorder %s50, %s51
    %p63 = scmp.eq.s32.totalorder %s20, 1
    %p64 = por %p62, %p63
    %p66 = scmp.ne.s32.totalorder %s51, %s65
    %p67 = scmp.eq.s32.totalorder %s20, 0
    %p68 = por %p66, %p67
    %s70 = sadd.s32 %s69, 1
    %p73 = scmp.eq.s32.totalorder %s14, 1
    %p74 = scmp.ne.s32.totalorder %s69, %s71
    %p75 = scmp.eq.s32.totalorder %s14, 0
    %p76 = por %p74, %p75
    %p77 = scmp.ne.s32.totalorder %s69, %s71
    %p78 = scmp.eq.s32.totalorder %s19, 1
    %p79 = por %p77, %p78
    %p80 = scmp.ne.s32.totalorder %s71, %s72
    %p81 = scmp.eq.s32.totalorder %s19, 0
    %p82 = por %p80, %p81
    %p83 = scmp.ne.s32.totalorder %s71, %s72
    %p84 = scmp.eq.s32.totalorder %s20, 1
    %p85 = por %p83, %p84
    %p87 = scmp.ne.s32.totalorder %s72, %s86
    %p88 = scmp.eq.s32.totalorder %s20, 0
    %p89 = por %p87, %p88
    %s91 = sadd.s32 %s90, 1
    %p94 = scmp.eq.s32.totalorder %s14, 1
    %p95 = scmp.ne.s32.totalorder %s90, %s92
    %p96 = scmp.eq.s32.totalorder %s14, 0
    %p97 = por %p95, %p96
    %p98 = scmp.ne.s32.totalorder %s90, %s92
    %p99 = scmp.eq.s32.totalorder %s19, 1
    %p100 = por %p98, %p99
    %p101 = scmp.ne.s32.totalorder %s92, %s93
    %p102 = scmp.eq.s32.totalorder %s19, 0
    %p103 = por %p101, %p102
    %p104 = scmp.ne.s32.totalorder %s92, %s93
    %p105 = scmp.eq.s32.totalorder %s20, 1
    %p106 = por %p104, %p105
    %p108 = scmp.ne.s32.totalorder %s93, %s107
    %p109 = scmp.eq.s32.totalorder %s20, 0
    %p110 = por %p108, %p109
    %s112 = sadd.s32 %s111, 1
    %p115 = scmp.eq.s32.totalorder %s14, 1
    %p116 = scmp.ne.s32.totalorder %s111, %s113
    %p117 = scmp.eq.s32.totalorder %s14, 0
    %p118 = por %p116, %p117
    %p119 = scmp.ne.s32.totalorder %s111, %s113
    %p120 = scmp.eq.s32.totalorder %s19, 1
    %p121 = por %p119, %p120
    %p122 = scmp.ne.s32.totalorder %s113, %s114
    %p123 = scmp.eq.s32.totalorder %s19, 0
    %p124 = por %p122, %p123
    %p125 = scmp.ne.s32.totalorder %s113, %s114
    %p126 = scmp.eq.s32.totalorder %s20, 1
    %p127 = por %p125, %p126
    %p129 = scmp.ne.s32.totalorder %s114, %s128
    %p130 = scmp.eq.s32.totalorder %s20, 0
    %p131 = por %p129, %p130
    %s133 = sadd.s32 %s132, 1
    %p136 = scmp.eq.s32.totalorder %s14, 1
    %p137 = scmp.ne.s32.totalorder %s132, %s134
    %p138 = scmp.eq.s32.totalorder %s14, 0
    %p139 = por %p137, %p138
    %p140 = scmp.ne.s32.totalorder %s132, %s134
    %p141 = scmp.eq.s32.totalorder %s19, 1
    %p142 = por %p140, %p141
    %p143 = scmp.ne.s32.totalorder %s134, %s135
    %p144 = scmp.eq.s32.totalorder %s19, 0
    %p145 = por %p143, %p144
    %p146 = scmp.ne.s32.totalorder %s134, %s135
    %p147 = scmp.eq.s32.totalorder %s20, 1
    %p148 = por %p146, %p147
    %p150 = scmp.ne.s32.totalorder %s135, %s149
    %p151 = scmp.eq.s32.totalorder %s20, 0
    %p152 = por %p150, %p151
    %s154 = sadd.s32 %s153, 1
    %p157 = scmp.eq.s32.totalorder %s14, 1
    %p158 = scmp.ne.s32.totalorder %s153, %s155
    %p159 = scmp.eq.s32.totalorder %s14, 0
    %p160 = por %p158, %p159
    %p161 = scmp.ne.s32.totalorder %s153, %s155
    %p162 = scmp.eq.s32.totalorder %s19, 1
    %p163 = por %p161, %p162
    %p164 = scmp.ne.s32.totalorder %s155, %s156
    %p165 = scmp.eq.s32.totalorder %s19, 0
    %p166 = por %p164, %p165
    %p167 = scmp.ne.s32.totalorder %s155, %s156
    %p168 = scmp.eq.s32.totalorder %s20, 1
    %p169 = por %p167, %p168
    %p171 = scmp.ne.s32.totalorder %s156, %s170
    %p172 = scmp.eq.s32.totalorder %s20, 0
    %p173 = por %p171, %p172
    %s174 = ssub.s32 %s14, %s21
    %p175 = scmp.eq.s32.totalorder %s174, 0
    %s177 = sadd.s32 %s176, 1
    %s178 = scalar_select %p175, %s176, %s177
    %p181 = pneg %p175
    %p182 = scmp.eq.s32.totalorder %s14, 1
    %p183 = por %p181, %p182
    %p184 = scmp.ne.s32.totalorder %s176, %s179
    %p185 = scmp.eq.s32.totalorder %s14, 0
    %p186 = por %p184, %p185
    %p187 = scmp.ne.s32.totalorder %s176, %s179
    %p188 = scmp.eq.s32.totalorder %s19, 1
    %p189 = por %p187, %p188
    %p190 = scmp.ne.s32.totalorder %s179, %s180
    %p191 = scmp.eq.s32.totalorder %s19, 0
    %p192 = por %p190, %p191
    %p193 = scmp.ne.s32.totalorder %s179, %s180
    %p194 = scmp.eq.s32.totalorder %s20, 1
    %p195 = por %p193, %p194
    %p197 = scmp.ne.s32.totalorder %s180, %s196
    %p198 = scmp.eq.s32.totalorder %s20, 0
    %p199 = por %p197, %p198
    %p200 = scmp.le.s32.totalorder 1, %s14
    %p201 = scmp.lt.s32.totalorder %s14, 3
    %p202 = pnand %p200, %p201
    %p203 = pneg %p202
    // Predicated region
    $region9: #{tpu_custom_call.1} parent=5 // pred_check
      _
    $region10: #{tpu_custom_call.1} parent=5 // pred_check_branch
      %205 = sbr.rel (%p202) target = $region12
    $region11: #{tpu_custom_call.1} parent=5 // pred_region
      %s206 = ssub.s32 %s14, 1
      // Predicated region
      $region13: #{tpu_custom_call.1} parent=11 // pred_check
        %p207 = pneg %p61
      $region14: #{tpu_custom_call.1} parent=11 // pred_check_branch
        %209 = sbr.rel (%p207) target = $region16
      $region15: #{tpu_custom_call.1} parent=11 // pred_region
        _
      $region16: #{tpu_custom_call.1} parent=11 // pred_fallthru
        _
      // Predicated region
      $region17: #{tpu_custom_call.1} parent=11 // pred_check
        %p210 = pneg %p82
      $region18: #{tpu_custom_call.1} parent=11 // pred_check_branch
        %212 = sbr.rel (%p210) target = $region20
      $region19: #{tpu_custom_call.1} parent=11 // pred_region
        _
      $region20: #{tpu_custom_call.1} parent=11 // pred_fallthru
        _
      // Predicated region
      $region21: #{tpu_custom_call.1} parent=11 // pred_check
        %p213 = pneg %p103
      $region22: #{tpu_custom_call.1} parent=11 // pred_check_branch
        %215 = sbr.rel (%p213) target = $region24
      $region23: #{tpu_custom_call.1} parent=11 // pred_region
        _
      $region24: #{tpu_custom_call.1} parent=11 // pred_fallthru
        _
      // Predicated region
      $region25: #{tpu_custom_call.1} parent=11 // pred_check
        %p216 = pneg %p124
      $region26: #{tpu_custom_call.1} parent=11 // pred_check_branch
        %218 = sbr.rel (%p216) target = $region28
      $region27: #{tpu_custom_call.1} parent=11 // pred_region
        _
      $region28: #{tpu_custom_call.1} parent=11 // pred_fallthru
        _
      // Predicated region
      $region29: #{tpu_custom_call.1} parent=11 // pred_check
        %p219 = pneg %p145
      $region30: #{tpu_custom_call.1} parent=11 // pred_check_branch
        %221 = sbr.rel (%p219) target = $region32
      $region31: #{tpu_custom_call.1} parent=11 // pred_region
        _
      $region32: #{tpu_custom_call.1} parent=11 // pred_fallthru
        _
      // Predicated region
      $region33: #{tpu_custom_call.1} parent=11 // pred_check
        %p222 = pneg %p166
      $region34: #{tpu_custom_call.1} parent=11 // pred_check_branch
        %224 = sbr.rel (%p222) target = $region36
      $region35: #{tpu_custom_call.1} parent=11 // pred_region
        _
      $region36: #{tpu_custom_call.1} parent=11 // pred_fallthru
        _
    $region12: #{tpu_custom_call.1} parent=5 // pred_fallthru
      _
    %p225 = scmp.lt.s32.totalorder %s14, 2
    // Predicated region
    $region37: #{tpu_custom_call.1} parent=5 // pred_check
      %p226 = pneg %p225
    $region38: #{tpu_custom_call.1} parent=5 // pred_check_branch
      %228 = sbr.rel (%p226) target = $region40
    $region39: #{tpu_custom_call.1} parent=5 // pred_region
      // Predicated region
      $region41: #{tpu_custom_call.1} parent=39 // pred_check
        %p229 = pneg %p34
      $region42: #{tpu_custom_call.1} parent=39 // pred_check_branch
        %231 = sbr.rel (%p229) target = $region44
      $region43: #{tpu_custom_call.1} parent=39 // pred_region
        %s232 = smul.u32 16, %s14
        %p233 = scmp.lt.s32.totalorder %s232, 31
        %s234 = scalar_select %p233, %s232, 31
        %s235 = smul.addr %s234, 4
        %s236 = scalar_lea.vmem %s0, %s235
        %s237 = smul.u32 16, %s14
      $region44: #{tpu_custom_call.1} parent=39 // pred_fallthru
        _
    $region40: #{tpu_custom_call.1} parent=5 // pred_fallthru
      _
    %p238 = scmp.le.s32.totalorder 1, %s14
    %p239 = scmp.lt.s32.totalorder %s14, 3
    %p240 = pnand %p238, %p239
    %p241 = pneg %p240
    // Predicated region
    $region45: #{tpu_custom_call.1} parent=5 // pred_check
      _
    $region46: #{tpu_custom_call.1} parent=5 // pred_check_branch
      %243 = sbr.rel (%p240) target = $region48
    $region47: #{tpu_custom_call.1} parent=5 // pred_region
      %s244 = ssub.s32 %s14, 1
      %s245 = smul.u32 16, %s19
      %p246 = scmp.lt.s32.totalorder %s245, 31
      %s247 = scalar_select %p246, %s245, 31
      %s248 = smul.addr %s247, 4
      %s249 = scalar_lea.vmem %s0, %s248
      %p250 = pneg %p40
      %p251 = pneg %p37
      %p252 = pneg %p61
      %p253 = pneg %p58
      %p254 = pneg %p82
      %p255 = pneg %p79
      %p256 = pneg %p103
      %p257 = pneg %p100
      %p258 = pneg %p124
      %p259 = pneg %p121
      %p260 = pneg %p145
      %p261 = pneg %p142
      %p262 = pneg %p166
      %p263 = pneg %p163
      %p264 = pneg %p192
      %p265 = pneg %p189
      %s266 = smul.u32 16, %s19
      %p267 = scmp.lt.s32.totalorder %s266, 31
      %s268 = scalar_select %p267, %s266, 31
      %s269 = smul.addr %s268, 8
      %s270 = scalar_lea.vmem %s7, %s269
      %s271 = smul.u32 16, %s19
      %p272 = scmp.lt.s32.totalorder %s271, 31
      %s273 = scalar_select %p272, %s271, 31
      %s274 = smul.addr %s273, 4
      %s275 = scalar_lea.vmem %s0, %s274
      %s276 = smul.u32 16, %s19
      %s277 = smul.u32 16, %s19
      %p278 = scmp.lt.s32.totalorder %s277, 31
      %s279 = scalar_select %p278, %s277, 31
      %s280 = smul.addr %s279, 8
      %s281 = scalar_lea.vmem %s7, %s280
      %s282 = smul.u32 16, %s19
      %v284 = vld [vmem:[%s275] sm:$0xf]
      %v285 = vld [vmem:[%s275 + $0x4] sm:$0xf]
      %v286 = vld [vmem:[%s275 + $0x8] sm:$0xf]
      %v287 = vld [vmem:[%s275 + $0xc] sm:$0xf]
      %v288 = vld [vmem:[%s275 + $0x10] sm:$0xf]
      %v289 = vld [vmem:[%s275 + $0x14] sm:$0xf]
      %v290 = vld [vmem:[%s275 + $0x18] sm:$0xf]
      %v291 = vld [vmem:[%s275 + $0x1c] sm:$0xf]
      %v292 = vld [vmem:[%s275 + $0x20] sm:$0xf]
      %v293 = vld [vmem:[%s275 + $0x24] sm:$0xf]
      %v294 = vld [vmem:[%s275 + $0x28] sm:$0xf]
      %v295 = vld [vmem:[%s275 + $0x2c] sm:$0xf]
      %v296 = vld [vmem:[%s275 + $0x30] sm:$0xf]
      %v297 = vld [vmem:[%s275 + $0x34] sm:$0xf]
      %v298 = vld [vmem:[%s275 + $0x38] sm:$0xf]
      %v299 = vld [vmem:[%s275 + $0x3c] sm:$0xf]
      %v300 = vld [vmem:[%s1] sm:$0xf]
      %v301 = vld [vmem:[%s1 + $0x4] sm:$0xf]
      %v302 = vld [vmem:[%s2] sm:$0x1]
      %v304 = vlaneseq
      %v305 = vshrl.u32 %v304, 7
      %v306 = vsub.s32 0, %v305
      %v307 = vrot.slane %v302, %v306
      %v325 = vunpack.c.l.b16 %v284
      %v326 = vunpack.c.l.b16 %v285
      %v327 = vunpack.c.l.b16 %v286
      %v328 = vunpack.c.l.b16 %v287
      %v329 = vunpack.c.l.b16 %v288
      %v330 = vunpack.c.l.b16 %v289
      %v331 = vunpack.c.l.b16 %v290
      %v332 = vunpack.c.l.b16 %v291
      %v333 = vunpack.c.l.b16 %v292
      %v334 = vunpack.c.l.b16 %v293
      %v335 = vunpack.c.l.b16 %v294
      %v336 = vunpack.c.l.b16 %v295
      %v337 = vunpack.c.l.b16 %v296
      %v338 = vunpack.c.l.b16 %v297
      %v339 = vunpack.c.l.b16 %v298
      %v340 = vunpack.c.l.b16 %v299
      %v341 = vpack.c.b16 %v326, %v325
      %v342 = vpack.c.b16 %v328, %v327
      %v343 = vpack.c.b16 %v330, %v329
      %v344 = vpack.c.b16 %v332, %v331
      %v345 = vpack.c.b16 %v334, %v333
      %v346 = vpack.c.b16 %v336, %v335
      %v347 = vpack.c.b16 %v338, %v337
      %v348 = vpack.c.b16 %v340, %v339
      %v351 = vunpack.c.l.b16 %v300
      %v352 = vunpack.c.l.b16 %v301
      %v353 = vpack.c.b16 %v352, %v351
      %vm355 = vcmask 130048
      %v357 = vsel %vm355, %v341, 0
      %v360 = vsel %vm355, %v342, 0
      %v363 = vsel %vm355, %v343, 0
      %v366 = vsel %vm355, %v344, 0
      %v369 = vsel %vm355, %v345, 0
      %v372 = vsel %vm355, %v346, 0
      %v375 = vsel %vm355, %v347, 0
      %v378 = vsel %vm355, %v348, 0
      %380 = vmatprep.subr.bf16.mxu0 0
      %381 = vmatpush1.bf16.msra.mxu0 %v353
      %382 = vmatprep.subr.bf16.mxu0 0
      %383 = vmatpush1.bf16.msra.mxu0 0
      %384 = vmatprep.subr.bf16.mxu0 0
      %385 = vmatpush1.bf16.msra.mxu0 0
      %386 = vmatprep.subr.bf16.mxu0 0
      %387 = vmatpush1.bf16.msra.mxu0 0
      %388 = vmatprep.subr.bf16.mxu0 0
      %389 = vmatpush1.bf16.msra.mxu0 0
      %390 = vmatprep.subr.bf16.mxu0 0
      %391 = vmatpush1.bf16.msra.mxu0 0
      %392 = vmatprep.subr.bf16.mxu0 0
      %393 = vmatpush1.bf16.msra.mxu0 0
      %394 = vmatprep.subr.bf16.mxu0 0
      %395 = vmatpush1.bf16.msra.mxu0 0
      %396 = vmatprep.subr.bf16.mxu0 0
      %397 = vmatpush1.bf16.msra.mxu0 0
      %398 = vmatprep.subr.bf16.mxu0 0
      %399 = vmatpush1.bf16.msra.mxu0 0
      %400 = vmatprep.subr.bf16.mxu0 0
      %401 = vmatpush1.bf16.msra.mxu0 0
      %402 = vmatprep.subr.bf16.mxu0 0
      %403 = vmatpush1.bf16.msra.mxu0 0
      %404 = vmatprep.subr.bf16.mxu0 0
      %405 = vmatpush1.bf16.msra.mxu0 0
      %406 = vmatprep.subr.bf16.mxu0 0
      %407 = vmatpush1.bf16.msra.mxu0 0
      %408 = vmatprep.subr.bf16.mxu0 0
      %409 = vmatpush1.bf16.msra.mxu0 0
      %410 = vmatprep.subr.bf16.mxu0 0
      %411 = vmatpush1.bf16.msra.mxu0 0
      %412 = vmatprep.mubr.bf16.mxu0 0
      %413 = vmatmul.mubr.bf16.gmra.mrb[0].mxu0 %v357
      %v414 = vpop.f32.mrb[0].mxu0
      %v415 = vadd.f32 %v307, %v414
      %v416 = vpop.f32.mrb[0].mxu0
      %v417 = vpop.f32.mrb[0].mxu0
      %v418 = vadd.f32 %v307, %v417
      %v419 = vpop.f32.mrb[0].mxu0
      %420 = vmatprep.mubr.bf16.mxu0 0
      %421 = vmatmul.mubr.bf16.gmra.mrb[0].mxu0 %v360
      %v422 = vpop.f32.mrb[0].mxu0
      %v423 = vadd.f32 %v307, %v422
      %v424 = vpop.f32.mrb[0].mxu0
      %v425 = vpop.f32.mrb[0].mxu0
      %v426 = vadd.f32 %v307, %v425
      %v427 = vpop.f32.mrb[0].mxu0
      %428 = vmatprep.mubr.bf16.mxu0 0
      %429 = vmatmul.mubr.bf16.gmra.mrb[0].mxu0 %v363
      %v430 = vpop.f32.mrb[0].mxu0
      %v431 = vadd.f32 %v307, %v430
      %v432 = vpop.f32.mrb[0].mxu0
      %v433 = vpop.f32.mrb[0].mxu0
      %v434 = vadd.f32 %v307, %v433
      %v435 = vpop.f32.mrb[0].mxu0
      %436 = vmatprep.mubr.bf16.mxu0 0
      %437 = vmatmul.mubr.bf16.gmra.mrb[0].mxu0 %v366
      %v438 = vpop.f32.mrb[0].mxu0
      %v439 = vadd.f32 %v307, %v438
      %v440 = vpop.f32.mrb[0].mxu0
      %v441 = vpop.f32.mrb[0].mxu0
      %v442 = vadd.f32 %v307, %v441
      %v443 = vpop.f32.mrb[0].mxu0
      %444 = vmatprep.mubr.bf16.mxu0 0
      %445 = vmatmul.mubr.bf16.gmra.mrb[0].mxu0 %v369
      %v446 = vpop.f32.mrb[0].mxu0
      %v447 = vadd.f32 %v307, %v446
      %v448 = vpop.f32.mrb[0].mxu0
      %v449 = vpop.f32.mrb[0].mxu0
      %v450 = vadd.f32 %v307, %v449
      %v451 = vpop.f32.mrb[0].mxu0
      %452 = vmatprep.mubr.bf16.mxu0 0
      %453 = vmatmul.mubr.bf16.gmra.mrb[0].mxu0 %v372
      %v454 = vpop.f32.mrb[0].mxu0
      %v455 = vadd.f32 %v307, %v454
      %v456 = vpop.f32.mrb[0].mxu0
      %v457 = vpop.f32.mrb[0].mxu0
      %v458 = vadd.f32 %v307, %v457
      %v459 = vpop.f32.mrb[0].mxu0
      %460 = vmatprep.mubr.bf16.mxu0 0
      %461 = vmatmul.mubr.bf16.gmra.mrb[0].mxu0 %v375
      %v462 = vpop.f32.mrb[0].mxu0
      %v463 = vadd.f32 %v307, %v462
      %v464 = vpop.f32.mrb[0].mxu0
      %v465 = vpop.f32.mrb[0].mxu0
      %v466 = vadd.f32 %v307, %v465
      %v467 = vpop.f32.mrb[0].mxu0
      %468 = vmatprep.mubr.bf16.mxu0 0
      %469 = vmatmul.mubr.bf16.gmra.mrb[0].mxu0 %v378
      %v470 = vpop.f32.mrb[0].mxu0
      %v471 = vadd.f32 %v307, %v470
      %v472 = vpop.f32.mrb[0].mxu0
      %v473 = vpop.f32.mrb[0].mxu0
      %v474 = vadd.f32 %v307, %v473
      %v475 = vpop.f32.mrb[0].mxu0
      %476 = vdwg.mxu0
      %v477 = vmax.f32 %v415, 0.0
      %v478 = vmax.f32 %v418, 0.0
      %v479 = vmax.f32 %v423, 0.0
      %v480 = vmax.f32 %v426, 0.0
      %v481 = vmax.f32 %v431, 0.0
      %v482 = vmax.f32 %v434, 0.0
      %v483 = vmax.f32 %v439, 0.0
      %v484 = vmax.f32 %v442, 0.0
      %v485 = vmax.f32 %v447, 0.0
      %v486 = vmax.f32 %v450, 0.0
      %v487 = vmax.f32 %v455, 0.0
      %v488 = vmax.f32 %v458, 0.0
      %v489 = vmax.f32 %v463, 0.0
      %v490 = vmax.f32 %v466, 0.0
      %v491 = vmax.f32 %v471, 0.0
      %v492 = vmax.f32 %v474, 0.0
      %v493 = vpack.c.bf16 %v478, %v477
      %v494 = vpack.c.bf16 %v480, %v479
      %v495 = vpack.c.bf16 %v482, %v481
      %v496 = vpack.c.bf16 %v484, %v483
      %v497 = vpack.c.bf16 %v486, %v485
      %v498 = vpack.c.bf16 %v488, %v487
      %v499 = vpack.c.bf16 %v490, %v489
      %v500 = vpack.c.bf16 %v492, %v491
      %v501 = vld [vmem:[%s3] sm:$0xf]
      %v502 = vld [vmem:[%s3 + $0x4] sm:$0xf]
      %v503 = vld [vmem:[%s3 + $0x8] sm:$0xf]
      %v504 = vld [vmem:[%s3 + $0xc] sm:$0xf]
      %v505 = vld [vmem:[%s3 + $0x10] sm:$0xf]
      %v506 = vld [vmem:[%s3 + $0x14] sm:$0xf]
      %v507 = vld [vmem:[%s3 + $0x18] sm:$0xf]
      %v508 = vld [vmem:[%s3 + $0x1c] sm:$0xf]
      %v509 = vld [vmem:[%s3 + $0x20] sm:$0xf]
      %v510 = vld [vmem:[%s3 + $0x24] sm:$0xf]
      %v511 = vld [vmem:[%s3 + $0x28] sm:$0xf]
      %v512 = vld [vmem:[%s3 + $0x2c] sm:$0xf]
      %v513 = vld [vmem:[%s3 + $0x30] sm:$0xf]
      %v514 = vld [vmem:[%s3 + $0x34] sm:$0xf]
      %v515 = vld [vmem:[%s3 + $0x38] sm:$0xf]
      %v516 = vld [vmem:[%s3 + $0x3c] sm:$0xf]
      %v517 = vld [vmem:[%s4] sm:$0x1]
      %v519 = vlaneseq
      %v520 = vshrl.u32 %v519, 7
      %v521 = vsub.s32 0, %v520
      %v522 = vrot.slane %v517, %v521
      %v540 = vunpack.c.l.b16 %v501
      %v541 = vunpack.c.l.b16 %v502
      %v542 = vunpack.c.l.b16 %v503
      %v543 = vunpack.c.l.b16 %v504
      %v544 = vunpack.c.l.b16 %v505
      %v545 = vunpack.c.l.b16 %v506
      %v546 = vunpack.c.l.b16 %v507
      %v547 = vunpack.c.l.b16 %v508
      %v548 = vunpack.c.l.b16 %v509
      %v549 = vunpack.c.l.b16 %v510
      %v550 = vunpack.c.l.b16 %v511
      %v551 = vunpack.c.l.b16 %v512
      %v552 = vunpack.c.l.b16 %v513
      %v553 = vunpack.c.l.b16 %v514
      %v554 = vunpack.c.l.b16 %v515
      %v555 = vunpack.c.l.b16 %v516
      %v556 = vpack.c.b16 %v541, %v540
      %v557 = vpack.c.b16 %v543, %v542
      %v558 = vpack.c.b16 %v545, %v544
      %v559 = vpack.c.b16 %v547, %v546
      %v560 = vpack.c.b16 %v549, %v548
      %v561 = vpack.c.b16 %v551, %v550
      %v562 = vpack.c.b16 %v553, %v552
      %v563 = vpack.c.b16 %v555, %v554
      %572 = vmatprep.subr.bf16.mxu0 0
      %573 = vmatpush1.bf16.msra.mxu0 %v556
      %574 = vmatprep.subr.bf16.mxu0 0
      %575 = vmatpush1.bf16.msra.mxu0 %v557
      %576 = vmatprep.subr.bf16.mxu0 0
      %577 = vmatpush1.bf16.msra.mxu0 %v558
      %578 = vmatprep.subr.bf16.mxu0 0
      %579 = vmatpush1.bf16.msra.mxu0 %v559
      %580 = vmatprep.subr.bf16.mxu0 0
      %581 = vmatpush1.bf16.msra.mxu0 %v560
      %582 = vmatprep.subr.bf16.mxu0 0
      %583 = vmatpush1.bf16.msra.mxu0 %v561
      %584 = vmatprep.subr.bf16.mxu0 0
      %585 = vmatpush1.bf16.msra.mxu0 %v562
      %586 = vmatprep.subr.bf16.mxu0 0
      %587 = vmatpush1.bf16.msra.mxu0 %v563
      %588 = vmatprep.subr.bf16.mxu0 0
      %589 = vmatpush1.bf16.msra.mxu0 0
      %590 = vmatprep.subr.bf16.mxu0 0
      %591 = vmatpush1.bf16.msra.mxu0 0
      %592 = vmatprep.subr.bf16.mxu0 0
      %593 = vmatpush1.bf16.msra.mxu0 0
      %594 = vmatprep.subr.bf16.mxu0 0
      %595 = vmatpush1.bf16.msra.mxu0 0
      %596 = vmatprep.subr.bf16.mxu0 0
      %597 = vmatpush1.bf16.msra.mxu0 0
      %598 = vmatprep.subr.bf16.mxu0 0
      %599 = vmatpush1.bf16.msra.mxu0 0
      %600 = vmatprep.subr.bf16.mxu0 0
      %601 = vmatpush1.bf16.msra.mxu0 0
      %602 = vmatprep.subr.bf16.mxu0 0
      %603 = vmatpush1.bf16.msra.mxu0 0
      %604 = vmatprep.mubr.bf16.mxu0 0
      %605 = vmatmul.mubr.bf16.gmra.mrb[0].mxu0 %v493
      %v606 = vpop.f32.mrb[0].mxu0
      %v607 = vadd.f32 %v522, %v606
      %v608 = vpop.f32.mrb[0].mxu0
      %v609 = vpop.f32.mrb[0].mxu0
      %v610 = vadd.f32 %v522, %v609
      %v611 = vpop.f32.mrb[0].mxu0
      %612 = vmatprep.mubr.bf16.mxu0 0
      %613 = vmatmul.mubr.bf16.gmra.mrb[0].mxu0 %v494
      %v614 = vpop.f32.mrb[0].mxu0
      %v615 = vadd.f32 %v522, %v614
      %v616 = vpop.f32.mrb[0].mxu0
      %v617 = vpop.f32.mrb[0].mxu0
      %v618 = vadd.f32 %v522, %v617
      %v619 = vpop.f32.mrb[0].mxu0
      %620 = vmatprep.mubr.bf16.mxu0 0
      %621 = vmatmul.mubr.bf16.gmra.mrb[0].mxu0 %v495
      %v622 = vpop.f32.mrb[0].mxu0
      %v623 = vadd.f32 %v522, %v622
      %v624 = vpop.f32.mrb[0].mxu0
      %v625 = vpop.f32.mrb[0].mxu0
      %v626 = vadd.f32 %v522, %v625
      %v627 = vpop.f32.mrb[0].mxu0
      %628 = vmatprep.mubr.bf16.mxu0 0
      %629 = vmatmul.mubr.bf16.gmra.mrb[0].mxu0 %v496
      %v630 = vpop.f32.mrb[0].mxu0
      %v631 = vadd.f32 %v522, %v630
      %v632 = vpop.f32.mrb[0].mxu0
      %v633 = vpop.f32.mrb[0].mxu0
      %v634 = vadd.f32 %v522, %v633
      %v635 = vpop.f32.mrb[0].mxu0
      %636 = vmatprep.mubr.bf16.mxu0 0
      %637 = vmatmul.mubr.bf16.gmra.mrb[0].mxu0 %v497
      %v638 = vpop.f32.mrb[0].mxu0
      %v639 = vadd.f32 %v522, %v638
      %v640 = vpop.f32.mrb[0].mxu0
      %v641 = vpop.f32.mrb[0].mxu0
      %v642 = vadd.f32 %v522, %v641
      %v643 = vpop.f32.mrb[0].mxu0
      %644 = vmatprep.mubr.bf16.mxu0 0
      %645 = vmatmul.mubr.bf16.gmra.mrb[0].mxu0 %v498
      %v646 = vpop.f32.mrb[0].mxu0
      %v647 = vadd.f32 %v522, %v646
      %v648 = vpop.f32.mrb[0].mxu0
      %v649 = vpop.f32.mrb[0].mxu0
      %v650 = vadd.f32 %v522, %v649
      %v651 = vpop.f32.mrb[0].mxu0
      %652 = vmatprep.mubr.bf16.mxu0 0
      %653 = vmatmul.mubr.bf16.gmra.mrb[0].mxu0 %v499
      %v654 = vpop.f32.mrb[0].mxu0
      %v655 = vadd.f32 %v522, %v654
      %v656 = vpop.f32.mrb[0].mxu0
      %v657 = vpop.f32.mrb[0].mxu0
      %v658 = vadd.f32 %v522, %v657
      %v659 = vpop.f32.mrb[0].mxu0
      %660 = vmatprep.mubr.bf16.mxu0 0
      %661 = vmatmul.mubr.bf16.gmra.mrb[0].mxu0 %v500
      %v662 = vpop.f32.mrb[0].mxu0
      %v663 = vadd.f32 %v522, %v662
      %v664 = vpop.f32.mrb[0].mxu0
      %v665 = vpop.f32.mrb[0].mxu0
      %v666 = vadd.f32 %v522, %v665
      %v667 = vpop.f32.mrb[0].mxu0
      %668 = vdwg.mxu0
      %v669 = vmax.f32 %v607, 0.0
      %v670 = vmax.f32 %v610, 0.0
      %v671 = vmax.f32 %v615, 0.0
      %v672 = vmax.f32 %v618, 0.0
      %v673 = vmax.f32 %v623, 0.0
      %v674 = vmax.f32 %v626, 0.0
      %v675 = vmax.f32 %v631, 0.0
      %v676 = vmax.f32 %v634, 0.0
      %v677 = vmax.f32 %v639, 0.0
      %v678 = vmax.f32 %v642, 0.0
      %v679 = vmax.f32 %v647, 0.0
      %v680 = vmax.f32 %v650, 0.0
      %v681 = vmax.f32 %v655, 0.0
      %v682 = vmax.f32 %v658, 0.0
      %v683 = vmax.f32 %v663, 0.0
      %v684 = vmax.f32 %v666, 0.0
      %v685 = vpack.c.bf16 %v670, %v669
      %v686 = vpack.c.bf16 %v672, %v671
      %v687 = vpack.c.bf16 %v674, %v673
      %v688 = vpack.c.bf16 %v676, %v675
      %v689 = vpack.c.bf16 %v678, %v677
      %v690 = vpack.c.bf16 %v680, %v679
      %v691 = vpack.c.bf16 %v682, %v681
      %v692 = vpack.c.bf16 %v684, %v683
      %v693 = vld [vmem:[%s5] sm:$0xf]
      %v694 = vld [vmem:[%s5 + $0x4] sm:$0xf]
      %v695 = vld [vmem:[%s5 + $0x8] sm:$0xf]
      %v696 = vld [vmem:[%s5 + $0xc] sm:$0xf]
      %v697 = vld [vmem:[%s5 + $0x10] sm:$0xf]
      %v698 = vld [vmem:[%s5 + $0x14] sm:$0xf]
      %v699 = vld [vmem:[%s5 + $0x18] sm:$0xf]
      %v700 = vld [vmem:[%s5 + $0x1c] sm:$0xf]
      %v701 = vld [vmem:[%s5 + $0x20] sm:$0xf]
      %v702 = vld [vmem:[%s5 + $0x24] sm:$0xf]
      %v703 = vld [vmem:[%s5 + $0x28] sm:$0xf]
      %v704 = vld [vmem:[%s5 + $0x2c] sm:$0xf]
      %v705 = vld [vmem:[%s5 + $0x30] sm:$0xf]
      %v706 = vld [vmem:[%s5 + $0x34] sm:$0xf]
      %v707 = vld [vmem:[%s5 + $0x38] sm:$0xf]
      %v708 = vld [vmem:[%s5 + $0x3c] sm:$0xf]
      %s709 = sld [smem:[#allocation2]]
      %v710 = vstv %s709
      %v727 = vunpack.c.l.b16 %v693
      %v728 = vunpack.c.l.b16 %v694
      %v729 = vunpack.c.l.b16 %v695
      %v730 = vunpack.c.l.b16 %v696
      %v731 = vunpack.c.l.b16 %v697
      %v732 = vunpack.c.l.b16 %v698
      %v733 = vunpack.c.l.b16 %v699
      %v734 = vunpack.c.l.b16 %v700
      %v735 = vunpack.c.l.b16 %v701
      %v736 = vunpack.c.l.b16 %v702
      %v737 = vunpack.c.l.b16 %v703
      %v738 = vunpack.c.l.b16 %v704
      %v739 = vunpack.c.l.b16 %v705
      %v740 = vunpack.c.l.b16 %v706
      %v741 = vunpack.c.l.b16 %v707
      %v742 = vunpack.c.l.b16 %v708
      %v743 = vpack.c.b16 %v728, %v727
      %v744 = vpack.c.b16 %v730, %v729
      %v745 = vpack.c.b16 %v732, %v731
      %v746 = vpack.c.b16 %v734, %v733
      %v747 = vpack.c.b16 %v736, %v735
      %v748 = vpack.c.b16 %v738, %v737
      %v749 = vpack.c.b16 %v740, %v739
      %v750 = vpack.c.b16 %v742, %v741
      %759 = vmatprep.subr.bf16.mxu0 0
      %760 = vmatpush1.bf16.msra.mxu0 %v743
      %761 = vmatprep.subr.bf16.mxu0 0
      %762 = vmatpush1.bf16.msra.mxu0 %v744
      %763 = vmatprep.subr.bf16.mxu0 0
      %764 = vmatpush1.bf16.msra.mxu0 %v745
      %765 = vmatprep.subr.bf16.mxu0 0
      %766 = vmatpush1.bf16.msra.mxu0 %v746
      %767 = vmatprep.subr.bf16.mxu0 0
      %768 = vmatpush1.bf16.msra.mxu0 %v747
      %769 = vmatprep.subr.bf16.mxu0 0
      %770 = vmatpush1.bf16.msra.mxu0 %v748
      %771 = vmatprep.subr.bf16.mxu0 0
      %772 = vmatpush1.bf16.msra.mxu0 %v749
      %773 = vmatprep.subr.bf16.mxu0 0
      %774 = vmatpush1.bf16.msra.mxu0 %v750
      %775 = vmatprep.subr.bf16.mxu0 0
      %776 = vmatpush1.bf16.msra.mxu0 0
      %777 = vmatprep.subr.bf16.mxu0 0
      %778 = vmatpush1.bf16.msra.mxu0 0
      %779 = vmatprep.subr.bf16.mxu0 0
      %780 = vmatpush1.bf16.msra.mxu0 0
      %781 = vmatprep.subr.bf16.mxu0 0
      %782 = vmatpush1.bf16.msra.mxu0 0
      %783 = vmatprep.subr.bf16.mxu0 0
      %784 = vmatpush1.bf16.msra.mxu0 0
      %785 = vmatprep.subr.bf16.mxu0 0
      %786 = vmatpush1.bf16.msra.mxu0 0
      %787 = vmatprep.subr.bf16.mxu0 0
      %788 = vmatpush1.bf16.msra.mxu0 0
      %789 = vmatprep.subr.bf16.mxu0 0
      %790 = vmatpush1.bf16.msra.mxu0 0
      %791 = vmatprep.mubr.bf16.mxu0 0
      %792 = vmatmul.mubr.bf16.gmra.mrb[0].mxu0 %v685
      %v793 = vpop.f32.mrb[0].mxu0
      %v794 = vadd.f32 %v710, %v793
      %v795 = vpop.f32.mrb[0].mxu0
      %v796 = vpop.f32.mrb[0].mxu0
      %v797 = vadd.f32 %v710, %v796
      %v798 = vpop.f32.mrb[0].mxu0
      %799 = vmatprep.mubr.bf16.mxu0 0
      %800 = vmatmul.mubr.bf16.gmra.mrb[0].mxu0 %v686
      %v801 = vpop.f32.mrb[0].mxu0
      %v802 = vadd.f32 %v710, %v801
      %v803 = vpop.f32.mrb[0].mxu0
      %v804 = vpop.f32.mrb[0].mxu0
      %v805 = vadd.f32 %v710, %v804
      %v806 = vpop.f32.mrb[0].mxu0
      %807 = vmatprep.mubr.bf16.mxu0 0
      %808 = vmatmul.mubr.bf16.gmra.mrb[0].mxu0 %v687
      %v809 = vpop.f32.mrb[0].mxu0
      %v810 = vadd.f32 %v710, %v809
      %v811 = vpop.f32.mrb[0].mxu0
      %v812 = vpop.f32.mrb[0].mxu0
      %v813 = vadd.f32 %v710, %v812
      %v814 = vpop.f32.mrb[0].mxu0
      %815 = vmatprep.mubr.bf16.mxu0 0
      %816 = vmatmul.mubr.bf16.gmra.mrb[0].mxu0 %v688
      %v817 = vpop.f32.mrb[0].mxu0
      %v818 = vadd.f32 %v710, %v817
      %v819 = vpop.f32.mrb[0].mxu0
      %v820 = vpop.f32.mrb[0].mxu0
      %v821 = vadd.f32 %v710, %v820
      %v822 = vpop.f32.mrb[0].mxu0
      %823 = vmatprep.mubr.bf16.mxu0 0
      %824 = vmatmul.mubr.bf16.gmra.mrb[0].mxu0 %v689
      %v825 = vpop.f32.mrb[0].mxu0
      %v826 = vadd.f32 %v710, %v825
      %v827 = vpop.f32.mrb[0].mxu0
      %v828 = vpop.f32.mrb[0].mxu0
      %v829 = vadd.f32 %v710, %v828
      %v830 = vpop.f32.mrb[0].mxu0
      %831 = vmatprep.mubr.bf16.mxu0 0
      %832 = vmatmul.mubr.bf16.gmra.mrb[0].mxu0 %v690
      %v833 = vpop.f32.mrb[0].mxu0
      %v834 = vadd.f32 %v710, %v833
      %v835 = vpop.f32.mrb[0].mxu0
      %v836 = vpop.f32.mrb[0].mxu0
      %v837 = vadd.f32 %v710, %v836
      %v838 = vpop.f32.mrb[0].mxu0
      %839 = vmatprep.mubr.bf16.mxu0 0
      %840 = vmatmul.mubr.bf16.gmra.mrb[0].mxu0 %v691
      %v841 = vpop.f32.mrb[0].mxu0
      %v842 = vadd.f32 %v710, %v841
      %v843 = vpop.f32.mrb[0].mxu0
      %v844 = vpop.f32.mrb[0].mxu0
      %v845 = vadd.f32 %v710, %v844
      %v846 = vpop.f32.mrb[0].mxu0
      %847 = vmatprep.mubr.bf16.mxu0 0
      %848 = vmatmul.mubr.bf16.gmra.mrb[0].mxu0 %v692
      %v849 = vpop.f32.mrb[0].mxu0
      %v850 = vadd.f32 %v710, %v849
      %v851 = vpop.f32.mrb[0].mxu0
      %v852 = vpop.f32.mrb[0].mxu0
      %v853 = vadd.f32 %v710, %v852
      %v854 = vpop.f32.mrb[0].mxu0
      %855 = vdwg.mxu0
      %vm856 = vcmask 7168
      %857 = vst.msk [vmem:[%s281] sm:$0xff] %vm856, %v794
      %858 = vst.msk [vmem:[%s281 + $0x8] sm:$0xff] %vm856, %v797
      %859 = vst.msk [vmem:[%s281 + $0x10] sm:$0xff] %vm856, %v802
      %860 = vst.msk [vmem:[%s281 + $0x18] sm:$0xff] %vm856, %v805
      %861 = vst.msk [vmem:[%s281 + $0x20] sm:$0xff] %vm856, %v810
      %862 = vst.msk [vmem:[%s281 + $0x28] sm:$0xff] %vm856, %v813
      %863 = vst.msk [vmem:[%s281 + $0x30] sm:$0xff] %vm856, %v818
      %864 = vst.msk [vmem:[%s281 + $0x38] sm:$0xff] %vm856, %v821
      %865 = vst.msk [vmem:[%s281 + $0x40] sm:$0xff] %vm856, %v826
      %866 = vst.msk [vmem:[%s281 + $0x48] sm:$0xff] %vm856, %v829
      %867 = vst.msk [vmem:[%s281 + $0x50] sm:$0xff] %vm856, %v834
      %868 = vst.msk [vmem:[%s281 + $0x58] sm:$0xff] %vm856, %v837
      %869 = vst.msk [vmem:[%s281 + $0x60] sm:$0xff] %vm856, %v842
      %870 = vst.msk [vmem:[%s281 + $0x68] sm:$0xff] %vm856, %v845
      %871 = vst.msk [vmem:[%s281 + $0x70] sm:$0xff] %vm856, %v850
      %872 = vst.msk [vmem:[%s281 + $0x78] sm:$0xff] %vm856, %v853
      %s873 = smul.u32 16, %s19
      %p874 = scmp.lt.s32.totalorder %s873, 31
      %s875 = scalar_select %p874, %s873, 31
      %s876 = smul.addr %s875, 8
      %s877 = scalar_lea.vmem %s7, %s876
      // Predicated region
      $region49: #{tpu_custom_call.1} parent=47 // pred_check
        %p878 = pneg %p189
      $region50: #{tpu_custom_call.1} parent=47 // pred_check_branch
        %880 = sbr.rel (%p878) target = $region52
      $region51: #{tpu_custom_call.1} parent=47 // pred_region
        %s881 = smul.u32 16, %s19
      $region52: #{tpu_custom_call.1} parent=47 // pred_fallthru
        _
    $region48: #{tpu_custom_call.1} parent=5 // pred_fallthru
      _
    %p882 = scmp.le.s32.totalorder 2, %s14
    // Predicated region
    $region53: #{tpu_custom_call.1} parent=5 // pred_check
      %p883 = pneg %p882
    $region54: #{tpu_custom_call.1} parent=5 // pred_check_branch
      %885 = sbr.rel (%p883) target = $region56
    $region55: #{tpu_custom_call.1} parent=5 // pred_region
      %s886 = ssub.s32 %s14, 2
      // Predicated region
      $region57: #{tpu_custom_call.1} parent=55 // pred_check
        %p887 = pneg %p195
      $region58: #{tpu_custom_call.1} parent=55 // pred_check_branch
        %889 = sbr.rel (%p887) target = $region60
      $region59: #{tpu_custom_call.1} parent=55 // pred_region
        %s890 = smul.u32 16, %s20
        %p891 = scmp.lt.s32.totalorder %s890, 31
        %s892 = scalar_select %p891, %s890, 31
        %s893 = smul.addr %s892, 8
        %s894 = scalar_lea.vmem %s7, %s893
      $region60: #{tpu_custom_call.1} parent=55 // pred_fallthru
        _
    $region56: #{tpu_custom_call.1} parent=5 // pred_fallthru
      _
  $region6: #{tpu_custom_call.1} parent=0 // loop_footer
    %s18 = sadd.s32 1, %s14
  $region7: #{tpu_custom_call.1} parent=0 // loop_footer_branch
    %13 = sbr.rel target = $region3
  $region8: #{tpu_custom_call.1} parent=0 // loop_exit
    _

</llo_original>
